<compile_context>
chip_gen: v7x
topology: tpu7x:2x2x1
jax: 0.10.0
libtpu: 0.0.40
codegen_flags: <defaults>
</compile_context>

<pallas_src>
import functools

import jax
import jax.numpy as jnp
from jax.experimental import pallas as pl
from jax.experimental.pallas import tpu as pltpu

# ----------------------------- model constants ------------------------------
SAMPLING_RATE = 16000.0
BLOCK_SIZE = 16
WIN_LENGTH = 32
N_MAG_HARMONIC = 32
N_MAG_NOISE = 16
N_MELS = 80

SPLIT_MAP = {
    "harmonic_magnitude": N_MAG_HARMONIC,
    "harmonic_phase": WIN_LENGTH // 2 + 1,
    "noise_magnitude": N_MAG_NOISE,
    "noise_phase": N_MAG_NOISE,
}
OUT_DIM = sum(SPLIT_MAP.values())          # 81
IN_DIM = N_MELS + 2 * BLOCK_SIZE           # 112 (mel + comb + noise)
N_PAD = 128                                # lane-dense output width (81 -> 128)
LANE = 128


def _round_up(x, m):
    return ((x + m - 1) // m) * m


# ------------------------------ helper math ---------------------------------
def _fmod1(x):
    """torch.fmod(x, 1.0): x - trunc(x) (sign follows dividend)."""
    trunc = jnp.where(x >= 0.0, jnp.floor(x), -jnp.floor(-x))
    return x - trunc


def _round_half_even(x):
    """torch.round: round half to even."""
    f = jnp.floor(x)
    d = x - f
    f_is_odd = jnp.floor(f * 0.5) * 2.0 != f
    round_up = (d > 0.5) | ((d == 0.5) & f_is_odd)
    return jnp.where(round_up, f + 1.0, f)


def _sinc(x):
    """torch.sinc: sin(pi x) / (pi x), sinc(0) = 1."""
    pix = jnp.pi * x
    safe = jnp.where(x == 0.0, 1.0, pix)
    return jnp.where(x == 0.0, 1.0, jnp.sin(safe) / safe)


# --------------------- kernel 1: per-frame phase recurrences -----------------
def phase_prep_kernel(f0_ref, s0_ref, ds0_ref, rsh_ref, *, n_frames,
                      sampling_rate, block_size):
    """Lane layout (B, T_pad): frames on the lane axis.

    Outputs per frame: s0 = f0/sr, ds0 = s0[t+1]-s0[t] (0 for last frame),
    rad_shift = fmod(cumsum(rad2)[t-1], 1) (0 for frame 0), with
    rad2 = fmod(rad[..., -1] + 0.5, 1) - 0.5 and rad[..., -1] computed
    analytically as s0*blk + 0.5*ds0*(blk-1).
    """
    T = n_frames
    Tp = f0_ref.shape[1]
    lane = jax.lax.broadcasted_iota(jnp.int32, f0_ref.shape, 1)

    s0 = f0_ref[...] / sampling_rate                          # (B, Tp)

    # next-frame shift along lanes; last real frame + padded lanes -> ds0 = 0
    s0_next = pltpu.roll(s0, shift=Tp - 1, axis=1)            # [t] <- s0[t+1]
    ds0 = jnp.where(lane >= T - 1, 0.0, s0_next - s0)

    # analytic last-sample phase of each frame (rad[..., -1])
    rad_last = s0 * float(block_size) + 0.5 * ds0 * float(block_size - 1)
    rad2 = _fmod1(rad_last + 0.5) - 0.5

    # exclusive prefix sum over frames: shift-by-one then Hillis-Steele scan
    # (log-depth roll+add on the lane axis; padded lanes contribute 0)
    x = jnp.where(lane == 0, 0.0, pltpu.roll(rad2, shift=1, axis=1))
    k = 1
    while k < Tp:
        x = x + jnp.where(lane >= k, pltpu.roll(x, shift=k, axis=1), 0.0)
        k *= 2
    rsh = _fmod1(x)   # == fmod(cumsum(rad2)[t-1], 1); 0 at frame 0

    s0_ref[...] = s0
    ds0_ref[...] = ds0
    rsh_ref[...] = rsh


def _phase_prep_pallas(f0_2d):
    B, T = f0_2d.shape
    Tp = _round_up(max(T, LANE), LANE)
    f0_pad = jnp.pad(f0_2d, ((0, 0), (0, Tp - T)))
    kernel = functools.partial(
        phase_prep_kernel, n_frames=T,
        sampling_rate=SAMPLING_RATE, block_size=BLOCK_SIZE)
    return pl.pallas_call(
        kernel,
        out_shape=tuple(jax.ShapeDtypeStruct((B, Tp), jnp.float32)
                        for _ in range(3)),
        grid=(1,),
        in_specs=[pl.BlockSpec((B, Tp), lambda i: (0, 0))],
        out_specs=tuple(pl.BlockSpec((B, Tp), lambda i: (0, 0))
                        for _ in range(3)),
    )(f0_pad)


# ----------------- kernel 2: fused combtooth + mel2ctrl projection -----------
def fused_combsub_kernel(phase_ref, mel_ref, noise_ref, wm_ref, wc_ref, wn_ref,
                         b_ref, out_ref, *, block_size):
    blk = block_size
    s0 = phase_ref[:, 0:1]        # (tm, 1)
    ds0 = phase_ref[:, 1:2]
    rsh = phase_ref[:, 2:3]

    n = jax.lax.broadcasted_iota(jnp.float32, (1, blk), 1)    # 0..blk-1
    rad = s0 * (n + 1.0) + 0.5 * ds0 * n * (n + 1.0) / blk + rsh
    rad = rad - _round_half_even(rad)
    s0b = s0 + ds0 * n / blk
    comb = _sinc(rad * pl.reciprocal(s0b + 1e-5, approx=True))  # (tm, blk)

    acc = jnp.dot(mel_ref[...], wm_ref[...], preferred_element_type=jnp.float32)
    acc = acc + jnp.dot(comb, wc_ref[...], preferred_element_type=jnp.float32)
    acc = acc + jnp.dot(noise_ref[...], wn_ref[...],
                        preferred_element_type=jnp.float32)
    out_ref[...] = acc + b_ref[...]


def _fused_combsub_pallas(phase, mel2d, noise2d, wm, wc, wn, b):
    M = mel2d.shape[0]
    # modest row tile: double-buffered VMEM stays small on all generations
    tm = 256 if M >= 256 else _round_up(M, 8)
    M_pad = _round_up(M, tm)
    if M_pad > M:
        pad = ((0, M_pad - M), (0, 0))
        phase = jnp.pad(phase, pad)
        mel2d = jnp.pad(mel2d, pad)
        noise2d = jnp.pad(noise2d, pad)

    kernel = functools.partial(fused_combsub_kernel, block_size=BLOCK_SIZE)
    flops = 2 * M_pad * (N_MELS + 2 * BLOCK_SIZE) * N_PAD
    bytes_accessed = 4 * (M_pad * (3 + N_MELS + BLOCK_SIZE + N_PAD)
                          + (N_MELS + 2 * BLOCK_SIZE + 1) * N_PAD)

    out = pl.pallas_call(
        kernel,
        out_shape=jax.ShapeDtypeStruct((M_pad, N_PAD), jnp.float32),
        grid=(M_pad // tm,),
        in_specs=[
            pl.BlockSpec((tm, 3), lambda i: (i, 0)),           # s0/ds0/rad_shift
            pl.BlockSpec((tm, N_MELS), lambda i: (i, 0)),      # mel
            pl.BlockSpec((tm, BLOCK_SIZE), lambda i: (i, 0)),  # noise
            pl.BlockSpec((N_MELS, N_PAD), lambda i: (0, 0)),   # W_mel (resident)
            pl.BlockSpec((BLOCK_SIZE, N_PAD), lambda i: (0, 0)),  # W_comb
            pl.BlockSpec((BLOCK_SIZE, N_PAD), lambda i: (0, 0)),  # W_noise
            pl.BlockSpec((1, N_PAD), lambda i: (0, 0)),        # bias
        ],
        out_specs=pl.BlockSpec((tm, N_PAD), lambda i: (i, 0)),
        compiler_params=pltpu.CompilerParams(
            dimension_semantics=("parallel",)),
        cost_estimate=pl.CostEstimate(
            flops=flops,
            transcendentals=2 * M_pad * BLOCK_SIZE,
            bytes_accessed=bytes_accessed),
    )(phase, mel2d, noise2d, wm, wc, wn, b)
    return out[:M]


# ------------------------------- full forward --------------------------------
def comb_sub_forward(params, mel_frames, f0_frames, noise_frames):
    """
    mel_frames:   (B, n_frames, n_mels)      f32
    f0_frames:    (B, n_frames, 1)           f32
    noise_frames: (B, n_frames, block_size)  f32  (== randn_like(combtooth).unfold)
    returns: (harmonic_magnitude, harmonic_phase, noise_magnitude, noise_phase)
    """
    B, T, _ = mel_frames.shape
    M = B * T

    # fast_source_gen per-frame recurrences (lane layout, kernel 1)
    f0_2d = f0_frames.reshape(B, T).astype(jnp.float32)
    s0_p, ds0_p, rsh_p = _phase_prep_pallas(f0_2d)
    phase = jnp.stack([s0_p[:, :T], ds0_p[:, :T], rsh_p[:, :T]],
                      axis=-1).reshape(M, 3)

    # split + zero-pad mel2ctrl weights once (N: 81 -> 128 for lane-dense stores)
    W = params["W"].astype(jnp.float32)
    b = params["b"].astype(jnp.float32)
    pad_n = ((0, 0), (0, N_PAD - OUT_DIM))
    wm = jnp.pad(W[:N_MELS], pad_n)
    wc = jnp.pad(W[N_MELS:N_MELS + BLOCK_SIZE], pad_n)
    wn = jnp.pad(W[N_MELS + BLOCK_SIZE:], pad_n)
    bp = jnp.pad(b, pad_n)

    mel2d = mel_frames.reshape(M, N_MELS).astype(jnp.float32)
    noise2d = noise_frames.reshape(M, BLOCK_SIZE).astype(jnp.float32)

    # fused combtooth synthesis + dense projection (kernel 2)
    ctrls_flat = _fused_combsub_pallas(phase, mel2d, noise2d, wm, wc, wn, bp)
    ctrls = ctrls_flat[:, :OUT_DIM].reshape(B, T, OUT_DIM)

    # split per split_map (insertion order preserved)
    offs, out = 0, {}
    for name, dim in SPLIT_MAP.items():
        out[name] = ctrls[..., offs:offs + dim]
        offs += dim

    # use_mean_filter=False -> mean_kernel_size == 1 -> mean_filter branch skipped
    # src_allpass is computed in the reference but not returned -> omitted
    return (
        out["harmonic_magnitude"],
        out["harmonic_phase"],
        out["noise_magnitude"],
        out["noise_phase"],
    )


# ---------------------------------- main -------------------------------------
if __name__ == "__main__":
    key = jax.random.PRNGKey(0)
    k_mel, k_f0, k_noise, k_w, k_b = jax.random.split(key, 5)

    B, T = 2, 8
    mel_frames = jax.random.normal(k_mel, (B, T, N_MELS), dtype=jnp.float32)
    f0_frames = 100.0 + 300.0 * jax.random.uniform(k_f0, (B, T, 1), dtype=jnp.float32)
    # noise = randn_like(combtooth) then unfolded -> generate frames directly
    noise_frames = jax.random.normal(k_noise, (B, T, BLOCK_SIZE), dtype=jnp.float32)

    params = {
        "W": 0.02 * jax.random.normal(k_w, (IN_DIM, OUT_DIM), dtype=jnp.float32),
        "b": 0.01 * jax.random.normal(k_b, (1, OUT_DIM), dtype=jnp.float32),
    }

    outs = comb_sub_forward(params, mel_frames, f0_frames, noise_frames)
    for o in outs:
        jax.block_until_ready(o)

    assert outs[0].shape == (B, T, N_MAG_HARMONIC)
    assert outs[1].shape == (B, T, WIN_LENGTH // 2 + 1)
    assert outs[2].shape == (B, T, N_MAG_NOISE)
    assert outs[3].shape == (B, T, N_MAG_NOISE)
    for o in outs:
        assert bool(jnp.all(jnp.isfinite(o)))
    print("KERNEL_OK")
</pallas_src>

<mosaic_0001>
module attributes {stable_mosaic.version = 11 : i64} {
  func.func @phase_prep_kernel(%arg0: i32, %arg1: memref<2x128xf32, #tpu.memory_space<vmem>>, %arg2: memref<2x128xf32, #tpu.memory_space<vmem>>, %arg3: memref<2x128xf32, #tpu.memory_space<vmem>>, %arg4: memref<2x128xf32, #tpu.memory_space<vmem>>) attributes {dimension_semantics = [#tpu.dimension_semantics<arbitrary>], iteration_bounds = array<i64: 1>, scalar_prefetch = 0 : i64, scratch_operands = 0 : i64, tpu.core_type = #tpu.core_type<tc>, window_params = [{pipeline_mode = #tpu.pipeline_mode<synchronous>, transform_indices = @transform_0, window_bounds = array<i64: 2, 128>}, {pipeline_mode = #tpu.pipeline_mode<synchronous>, transform_indices = @transform_1, window_bounds = array<i64: 2, 128>}, {pipeline_mode = #tpu.pipeline_mode<synchronous>, transform_indices = @transform_2, window_bounds = array<i64: 2, 128>}, {pipeline_mode = #tpu.pipeline_mode<synchronous>, transform_indices = @transform_3, window_bounds = array<i64: 2, 128>}]} {
    %0 = tpu.iota {dimensions = array<i32: 1>} : vector<2x128xi32>
    %c0 = arith.constant 0 : index
    %c0_0 = arith.constant 0 : index
    %1 = vector.load %arg1[%c0, %c0_0] : memref<2x128xf32, #tpu.memory_space<vmem>>, vector<2x128xf32>
    %cst = arith.constant 1.600000e+04 : f32
    %2 = vector.broadcast %cst : f32 to vector<2x128xf32>
    %3 = arith.divf %1, %2 : vector<2x128xf32>
    %c127_i32 = arith.constant 127 : i32
    %4 = tpu.dynamic_rotate %3 by %c127_i32 dim 1 : vector<2x128xf32>, i32 -> vector<2x128xf32>
    %c7_i32 = arith.constant 7 : i32
    %5 = vector.broadcast %c7_i32 : i32 to vector<2x128xi32>
    %6 = arith.cmpi sge, %0, %5 : vector<2x128xi32>
    %7 = arith.subf %4, %3 : vector<2x128xf32>
    %cst_1 = arith.constant 0.000000e+00 : f32
    %8 = vector.broadcast %cst_1 : f32 to vector<2x128xf32>
    %9 = arith.select %6, %8, %7 : vector<2x128xi1>, vector<2x128xf32>
    %cst_2 = arith.constant 1.600000e+01 : f32
    %10 = vector.broadcast %cst_2 : f32 to vector<2x128xf32>
    %11 = arith.mulf %3, %10 : vector<2x128xf32>
    %cst_3 = arith.constant 5.000000e-01 : f32
    %12 = vector.broadcast %cst_3 : f32 to vector<2x128xf32>
    %13 = arith.mulf %12, %9 : vector<2x128xf32>
    %cst_4 = arith.constant 1.500000e+01 : f32
    %14 = vector.broadcast %cst_4 : f32 to vector<2x128xf32>
    %15 = arith.mulf %13, %14 : vector<2x128xf32>
    %16 = arith.addf %11, %15 : vector<2x128xf32>
    %cst_5 = arith.constant 5.000000e-01 : f32
    %17 = vector.broadcast %cst_5 : f32 to vector<2x128xf32>
    %18 = arith.addf %16, %17 : vector<2x128xf32>
    %cst_6 = arith.constant 0.000000e+00 : f32
    %19 = vector.broadcast %cst_6 : f32 to vector<2x128xf32>
    %20 = arith.cmpf oge, %18, %19 : vector<2x128xf32>
    %21 = math.floor %18 : vector<2x128xf32>
    %cst_7 = arith.constant 0.000000e+00 : f32
    %22 = vector.broadcast %cst_7 : f32 to vector<2x128xf32>
    %23 = arith.subf %22, %18 : vector<2x128xf32>
    %24 = math.floor %23 : vector<2x128xf32>
    %cst_8 = arith.constant 0.000000e+00 : f32
    %25 = vector.broadcast %cst_8 : f32 to vector<2x128xf32>
    %26 = arith.subf %25, %24 : vector<2x128xf32>
    %27 = arith.select %20, %21, %26 : vector<2x128xi1>, vector<2x128xf32>
    %28 = arith.subf %18, %27 : vector<2x128xf32>
    %cst_9 = arith.constant 5.000000e-01 : f32
    %29 = vector.broadcast %cst_9 : f32 to vector<2x128xf32>
    %30 = arith.subf %28, %29 : vector<2x128xf32>
    %c0_i32 = arith.constant 0 : i32
    %31 = vector.broadcast %c0_i32 : i32 to vector<2x128xi32>
    %32 = arith.cmpi eq, %0, %31 : vector<2x128xi32>
    %c1_i32 = arith.constant 1 : i32
    %33 = tpu.dynamic_rotate %30 by %c1_i32 dim 1 : vector<2x128xf32>, i32 -> vector<2x128xf32>
    %cst_10 = arith.constant 0.000000e+00 : f32
    %34 = vector.broadcast %cst_10 : f32 to vector<2x128xf32>
    %35 = arith.select %32, %34, %33 : vector<2x128xi1>, vector<2x128xf32>
    %c1_i32_11 = arith.constant 1 : i32
    %36 = vector.broadcast %c1_i32_11 : i32 to vector<2x128xi32>
    %37 = arith.cmpi sge, %0, %36 : vector<2x128xi32>
    %c1_i32_12 = arith.constant 1 : i32
    %38 = tpu.dynamic_rotate %35 by %c1_i32_12 dim 1 : vector<2x128xf32>, i32 -> vector<2x128xf32>
    %cst_13 = arith.constant 0.000000e+00 : f32
    %39 = vector.broadcast %cst_13 : f32 to vector<2x128xf32>
    %40 = arith.select %37, %38, %39 : vector<2x128xi1>, vector<2x128xf32>
    %41 = arith.addf %35, %40 : vector<2x128xf32>
    %c2_i32 = arith.constant 2 : i32
    %42 = vector.broadcast %c2_i32 : i32 to vector<2x128xi32>
    %43 = arith.cmpi sge, %0, %42 : vector<2x128xi32>
    %c2_i32_14 = arith.constant 2 : i32
    %44 = tpu.dynamic_rotate %41 by %c2_i32_14 dim 1 : vector<2x128xf32>, i32 -> vector<2x128xf32>
    %cst_15 = arith.constant 0.000000e+00 : f32
    %45 = vector.broadcast %cst_15 : f32 to vector<2x128xf32>
    %46 = arith.select %43, %44, %45 : vector<2x128xi1>, vector<2x128xf32>
    %47 = arith.addf %41, %46 : vector<2x128xf32>
    %c4_i32 = arith.constant 4 : i32
    %48 = vector.broadcast %c4_i32 : i32 to vector<2x128xi32>
    %49 = arith.cmpi sge, %0, %48 : vector<2x128xi32>
    %c4_i32_16 = arith.constant 4 : i32
    %50 = tpu.dynamic_rotate %47 by %c4_i32_16 dim 1 : vector<2x128xf32>, i32 -> vector<2x128xf32>
    %cst_17 = arith.constant 0.000000e+00 : f32
    %51 = vector.broadcast %cst_17 : f32 to vector<2x128xf32>
    %52 = arith.select %49, %50, %51 : vector<2x128xi1>, vector<2x128xf32>
    %53 = arith.addf %47, %52 : vector<2x128xf32>
    %c8_i32 = arith.constant 8 : i32
    %54 = vector.broadcast %c8_i32 : i32 to vector<2x128xi32>
    %55 = arith.cmpi sge, %0, %54 : vector<2x128xi32>
    %c8_i32_18 = arith.constant 8 : i32
    %56 = tpu.dynamic_rotate %53 by %c8_i32_18 dim 1 : vector<2x128xf32>, i32 -> vector<2x128xf32>
    %cst_19 = arith.constant 0.000000e+00 : f32
    %57 = vector.broadcast %cst_19 : f32 to vector<2x128xf32>
    %58 = arith.select %55, %56, %57 : vector<2x128xi1>, vector<2x128xf32>
    %59 = arith.addf %53, %58 : vector<2x128xf32>
    %c16_i32 = arith.constant 16 : i32
    %60 = vector.broadcast %c16_i32 : i32 to vector<2x128xi32>
    %61 = arith.cmpi sge, %0, %60 : vector<2x128xi32>
    %c16_i32_20 = arith.constant 16 : i32
    %62 = tpu.dynamic_rotate %59 by %c16_i32_20 dim 1 : vector<2x128xf32>, i32 -> vector<2x128xf32>
    %cst_21 = arith.constant 0.000000e+00 : f32
    %63 = vector.broadcast %cst_21 : f32 to vector<2x128xf32>
    %64 = arith.select %61, %62, %63 : vector<2x128xi1>, vector<2x128xf32>
    %65 = arith.addf %59, %64 : vector<2x128xf32>
    %c32_i32 = arith.constant 32 : i32
    %66 = vector.broadcast %c32_i32 : i32 to vector<2x128xi32>
    %67 = arith.cmpi sge, %0, %66 : vector<2x128xi32>
    %c32_i32_22 = arith.constant 32 : i32
    %68 = tpu.dynamic_rotate %65 by %c32_i32_22 dim 1 : vector<2x128xf32>, i32 -> vector<2x128xf32>
    %cst_23 = arith.constant 0.000000e+00 : f32
    %69 = vector.broadcast %cst_23 : f32 to vector<2x128xf32>
    %70 = arith.select %67, %68, %69 : vector<2x128xi1>, vector<2x128xf32>
    %71 = arith.addf %65, %70 : vector<2x128xf32>
    %c64_i32 = arith.constant 64 : i32
    %72 = vector.broadcast %c64_i32 : i32 to vector<2x128xi32>
    %73 = arith.cmpi sge, %0, %72 : vector<2x128xi32>
    %c64_i32_24 = arith.constant 64 : i32
    %74 = tpu.dynamic_rotate %71 by %c64_i32_24 dim 1 : vector<2x128xf32>, i32 -> vector<2x128xf32>
    %cst_25 = arith.constant 0.000000e+00 : f32
    %75 = vector.broadcast %cst_25 : f32 to vector<2x128xf32>
    %76 = arith.select %73, %74, %75 : vector<2x128xi1>, vector<2x128xf32>
    %77 = arith.addf %71, %76 : vector<2x128xf32>
    %cst_26 = arith.constant 0.000000e+00 : f32
    %78 = vector.broadcast %cst_26 : f32 to vector<2x128xf32>
    %79 = arith.cmpf oge, %77, %78 : vector<2x128xf32>
    %80 = math.floor %77 : vector<2x128xf32>
    %cst_27 = arith.constant 0.000000e+00 : f32
    %81 = vector.broadcast %cst_27 : f32 to vector<2x128xf32>
    %82 = arith.subf %81, %77 : vector<2x128xf32>
    %83 = math.floor %82 : vector<2x128xf32>
    %cst_28 = arith.constant 0.000000e+00 : f32
    %84 = vector.broadcast %cst_28 : f32 to vector<2x128xf32>
    %85 = arith.subf %84, %83 : vector<2x128xf32>
    %86 = arith.select %79, %80, %85 : vector<2x128xi1>, vector<2x128xf32>
    %87 = arith.subf %77, %86 : vector<2x128xf32>
    %c0_29 = arith.constant 0 : index
    %c0_30 = arith.constant 0 : index
    %88 = vector.load %arg2[%c0_29, %c0_30] : memref<2x128xf32, #tpu.memory_space<vmem>>, vector<2x128xf32>
    tpu.vector_store %arg2[%c0_29, %c0_30], %3 {strides = array<i32>} : memref<2x128xf32, #tpu.memory_space<vmem>>, vector<2x128xf32>,
    %c0_31 = arith.constant 0 : index
    %c0_32 = arith.constant 0 : index
    %89 = vector.load %arg3[%c0_31, %c0_32] : memref<2x128xf32, #tpu.memory_space<vmem>>, vector<2x128xf32>
    tpu.vector_store %arg3[%c0_31, %c0_32], %9 {strides = array<i32>} : memref<2x128xf32, #tpu.memory_space<vmem>>, vector<2x128xf32>,
    %c0_33 = arith.constant 0 : index
    %c0_34 = arith.constant 0 : index
    %90 = vector.load %arg4[%c0_33, %c0_34] : memref<2x128xf32, #tpu.memory_space<vmem>>, vector<2x128xf32>
    tpu.vector_store %arg4[%c0_33, %c0_34], %87 {strides = array<i32>} : memref<2x128xf32, #tpu.memory_space<vmem>>, vector<2x128xf32>,
    return
  }
  func.func @transform_0(%arg0: i32) -> (i32, i32) {
    %c0_i32 = arith.constant 0 : i32
    %c0_i32_0 = arith.constant 0 : i32
    %c0_i32_1 = arith.constant 0 : i32
    return %c0_i32, %c0_i32_0 : i32, i32
  }
  func.func @transform_1(%arg0: i32) -> (i32, i32) {
    %c0_i32 = arith.constant 0 : i32
    %c0_i32_0 = arith.constant 0 : i32
    %c0_i32_1 = arith.constant 0 : i32
    return %c0_i32, %c0_i32_0 : i32, i32
  }
  func.func @transform_2(%arg0: i32) -> (i32, i32) {
    %c0_i32 = arith.constant 0 : i32
    %c0_i32_0 = arith.constant 0 : i32
    %c0_i32_1 = arith.constant 0 : i32
    return %c0_i32, %c0_i32_0 : i32, i32
  }
  func.func @transform_3(%arg0: i32) -> (i32, i32) {
    %c0_i32 = arith.constant 0 : i32
    %c0_i32_0 = arith.constant 0 : i32
    %c0_i32_1 = arith.constant 0 : i32
    return %c0_i32, %c0_i32_0 : i32, i32
  }
}

</mosaic_0001>

<llo_original>
// kernel: tpu_custom_call.1
$region0: #{tpu_custom_call.1}
  #allocation0 [shape = 'u32[]', space=smem, size = 0x4, offset = 0x4, fixed_abs, tag = 'smem constant byte address 0x4 - core index']
  #allocation1 [shape = 'u32[144,128]{1,0:T(1,128)}', space=vmem, size = 0x12000, scoped, tag = 'internal scratch']
  %s0 = inlined_call_operand.hbm [shape: f32[2,128], index: 0, kind: input, shape index: {}]
  %s1 = inlined_call_operand.hbm [shape: f32[2,128], index: 1, kind: output, shape index: {0}]
  %s2 = inlined_call_operand.hbm [shape: f32[2,128], index: 2, kind: output, shape index: {1}]
  %s3 = inlined_call_operand.hbm [shape: f32[2,128], index: 3, kind: output, shape index: {2}]
  %4 = xla_tuple %s1, %s2, %s3
  %s5 = sld [smem:[#allocation0]]
  $region34: #{tpu_custom_call.1} parent=0
    _
  %s7 = ssub.s32 1, %s5
  %s8 = scalar_select 0, %s7, %s5
  $region1: #{tpu_custom_call.1} parent=0
    #allocation2 [shape = 'u8[1024]{0}', space=vmem, size = 0x400, scoped, tag = 'input window, operand 0, single buffered']
    #allocation3 [shape = 's32[1]{0}', space=sflag, size = 0x4, scoped, tag = 'scoped memory for tpu_custom_call.1']
    #allocation4 [shape = 's32[1]{0}', space=sflag, size = 0x4, scoped, tag = 'scoped memory for tpu_custom_call.1']
    #allocation5 [shape = 'u8[1024]{0}', space=vmem, size = 0x400, scoped, tag = 'output window, operand 0, single buffered']
    #allocation6 [shape = 'u8[1024]{0}', space=vmem, size = 0x400, scoped, tag = 'output window, operand 1, single buffered']
    #allocation7 [shape = 's32[1]{0}', space=sflag, size = 0x4, scoped, tag = 'scoped memory for tpu_custom_call.1']
    #allocation8 [shape = 'u8[1024]{0}', space=vmem, size = 0x400, scoped, tag = 'output window, operand 2, single buffered']
    %9 = vsyncpa [#allocation3], 0
    %10 = vsyncpa [#allocation4], 0
    %11 = vsyncpa [#allocation7], 0
    // Predicated region
    $region2: #{tpu_custom_call.1} parent=1 // pred_check
      _
    $region3: #{tpu_custom_call.1} parent=1 // pred_check_branch
      %13 = sbr.rel (0) target = $region5
    $region4: #{tpu_custom_call.1} parent=1 // pred_region
      %s15 = ssub.s32 32, 32
      %16 = vsyncadd [#allocation3], %s15
      %s18 = sshll.u32 [#allocation2], 4
      %s19 = int_to_ptr.vmem [resolvable:$true] %s18
      %21 = dma.hbm_to_vmem [thread:$0]  %s0, 32, %s19, [#allocation3]
    $region5: #{tpu_custom_call.1} parent=1 // pred_fallthru
      _
    // Predicated region
    $region6: #{tpu_custom_call.1} parent=1 // pred_check
      _
    $region7: #{tpu_custom_call.1} parent=1 // pred_check_branch
      %23 = sbr.rel (0) target = $region9
    $region8: #{tpu_custom_call.1} parent=1 // pred_region
      %24 = dma.done [#allocation3], 32
    $region9: #{tpu_custom_call.1} parent=1 // pred_fallthru
      _
    %v25 = vlaneseq
    %v26 = vand.u32 %v25, 127
    %v27 = vld [vmem:[#allocation2] sm:$0x3]
    %v28 = vrcp.pop 16000.0
    %v29 = vmul.f32 %v27, %v28
    %30 = vrot.lane.b32.xlu0 %v29, 127
    %v31 = vpop.permute.xlu0 %30
    %vm32 = vcmp.ge.s32.totalorder %v26, 7
    %v33 = vsub.f32 %v31, %v29
    %v34 = vsel %vm32, 0.0, %v33
    %v35 = vmul.f32 %v29, 16.0
    %v36 = vmul.f32 %v34, 0.5
    %v37 = vmul.f32 %v36, 15.0
    %v38 = vadd.f32 %v35, %v37
    %v39 = vadd.f32 %v38, 0.5
    %vm40 = vcmp.ge.f32.partialorder %v39, 0.0
    %v41 = vfloor.f32 %v39
    %v42 = vsub.f32 0.0, %v39
    %v43 = vfloor.f32 %v42
    %v44 = vsub.f32 0.0, %v43
    %v45 = vsel %vm40, %v41, %v44
    %v46 = vsub.f32 %v39, %v45
    %v47 = vsub.f32 %v46, 0.5
    %vm48 = vcmp.eq.s32.totalorder %v26, 0
    %49 = vrot.lane.b32.xlu0 %v47, 1
    %v50 = vpop.permute.xlu0 %49
    %v51 = vsel %vm48, 0.0, %v50
    %vm52 = vcmp.ge.s32.totalorder %v26, 1
    %53 = vrot.lane.b32.xlu0 %v51, 1
    %v54 = vpop.permute.xlu0 %53
    %v55 = vsel %vm52, %v54, 0.0
    %v56 = vadd.f32 %v51, %v55
    %vm57 = vcmp.ge.s32.totalorder %v26, 2
    %58 = vrot.lane.b32.xlu0 %v56, 2
    %v59 = vpop.permute.xlu0 %58
    %v60 = vsel %vm57, %v59, 0.0
    %v61 = vadd.f32 %v56, %v60
    %vm62 = vcmp.ge.s32.totalorder %v26, 4
    %63 = vrot.lane.b32.xlu0 %v61, 4
    %v64 = vpop.permute.xlu0 %63
    %v65 = vsel %vm62, %v64, 0.0
    %v66 = vadd.f32 %v61, %v65
    %vm67 = vcmp.ge.s32.totalorder %v26, 8
    %68 = vrot.lane.b32.xlu0 %v66, 8
    %v69 = vpop.permute.xlu0 %68
    %v70 = vsel %vm67, %v69, 0.0
    %v71 = vadd.f32 %v66, %v70
    %vm72 = vcmp.ge.s32.totalorder %v26, 16
    %73 = vrot.lane.b32.xlu0 %v71, 16
    %v74 = vpop.permute.xlu0 %73
    %v75 = vsel %vm72, %v74, 0.0
    %v76 = vadd.f32 %v71, %v75
    %vm77 = vcmp.ge.s32.totalorder %v26, 32
    %78 = vrot.lane.b32.xlu0 %v76, 32
    %v79 = vpop.permute.xlu0 %78
    %v80 = vsel %vm77, %v79, 0.0
    %v81 = vadd.f32 %v76, %v80
    %vm82 = vcmp.ge.s32.totalorder %v26, 64
    %83 = vrot.lane.b32.xlu0 %v81, 64
    %v84 = vpop.permute.xlu0 %83
    %v85 = vsel %vm82, %v84, 0.0
    %v86 = vadd.f32 %v81, %v85
    %vm87 = vcmp.ge.f32.partialorder %v86, 0.0
    %v88 = vfloor.f32 %v86
    %v89 = vsub.f32 0.0, %v86
    %v90 = vfloor.f32 %v89
    %v91 = vsub.f32 0.0, %v90
    %v92 = vsel %vm87, %v88, %v91
    %v93 = vsub.f32 %v86, %v92
    %94 = vst [vmem:[#allocation5] sm:$0x3] %v29
    %95 = vst [vmem:[#allocation6] sm:$0x3] %v34
    %96 = vst [vmem:[#allocation8] sm:$0x3] %v93
    // Predicated region
    $region10: #{tpu_custom_call.1} parent=1 // pred_check
      _
    $region11: #{tpu_custom_call.1} parent=1 // pred_check_branch
      %98 = sbr.rel (0) target = $region13
    $region12: #{tpu_custom_call.1} parent=1 // pred_region
      %s100 = ssub.s32 32, 32
      %101 = vsyncadd [#allocation4], %s100
      %s103 = sshll.u32 [#allocation5], 4
      %s104 = int_to_ptr.vmem [resolvable:$true] %s103
      %106 = dma.vmem_to_hbm [thread:$0]  %s104, 32, %s1, [#allocation4]
    $region13: #{tpu_custom_call.1} parent=1 // pred_fallthru
      _
    // Predicated region
    $region14: #{tpu_custom_call.1} parent=1 // pred_check
      _
    $region15: #{tpu_custom_call.1} parent=1 // pred_check_branch
      %108 = sbr.rel (0) target = $region17
    $region16: #{tpu_custom_call.1} parent=1 // pred_region
      %s110 = ssub.s32 32, 32
      %111 = vsyncadd [#allocation7], %s110
      %s113 = sshll.u32 [#allocation6], 4
      %s114 = int_to_ptr.vmem [resolvable:$true] %s113
      %116 = dma.vmem_to_hbm [thread:$0]  %s114, 32, %s2, [#allocation7]
    $region17: #{tpu_custom_call.1} parent=1 // pred_fallthru
      _
    // Predicated region
    $region18: #{tpu_custom_call.1} parent=1 // pred_check
      _
    $region19: #{tpu_custom_call.1} parent=1 // pred_check_branch
      %118 = sbr.rel (0) target = $region21
    $region20: #{tpu_custom_call.1} parent=1 // pred_region
      %s120 = ssub.s32 32, 32
      %121 = vsyncadd [#allocation7], %s120
      %s123 = sshll.u32 [#allocation8], 4
      %s124 = int_to_ptr.vmem [resolvable:$true] %s123
      %126 = dma.vmem_to_hbm [thread:$0]  %s124, 32, %s3, [#allocation7]
    $region21: #{tpu_custom_call.1} parent=1 // pred_fallthru
      _
    // Predicated region
    $region22: #{tpu_custom_call.1} parent=1 // pred_check
      _
    $region23: #{tpu_custom_call.1} parent=1 // pred_check_branch
      %128 = sbr.rel (0) target = $region25
    $region24: #{tpu_custom_call.1} parent=1 // pred_region
      %129 = dma.done [#allocation4], 32
    $region25: #{tpu_custom_call.1} parent=1 // pred_fallthru
      _
    // Predicated region
    $region26: #{tpu_custom_call.1} parent=1 // pred_check
      _
    $region27: #{tpu_custom_call.1} parent=1 // pred_check_branch
      %131 = sbr.rel (0) target = $region29
    $region28: #{tpu_custom_call.1} parent=1 // pred_region
      %132 = dma.done [#allocation7], 32
    $region29: #{tpu_custom_call.1} parent=1 // pred_fallthru
      _
    // Predicated region
    $region30: #{tpu_custom_call.1} parent=1 // pred_check
      _
    $region31: #{tpu_custom_call.1} parent=1 // pred_check_branch
      %134 = sbr.rel (0) target = $region33
    $region32: #{tpu_custom_call.1} parent=1 // pred_region
      %135 = dma.done [#allocation7], 32
    $region33: #{tpu_custom_call.1} parent=1 // pred_fallthru
      _
    %136 = vsyncpa [#allocation3], 1
    %137 = vsyncpa [#allocation4], 1
    %138 = vsyncpa [#allocation7], 1

</llo_original>
